<compile_context>
chip_gen: v6e
topology: v6e:2x2x1
jax: 0.10.0
libtpu: 0.0.40
codegen_flags: <defaults>
</compile_context>

<pallas_src>
import math

import jax
import jax.numpy as jnp
from jax.experimental import pallas as pl
from jax.experimental.pallas import tpu as pltpu


def _round_up(x, m):
    return ((x + m - 1) // m) * m


def _gelu_exact(x):
    # torch.nn.GELU() default: exact erf formulation.
    return 0.5 * x * (1.0 + jax.lax.erf(x * (1.0 / math.sqrt(2.0))))


def _gelu_tanh(x):
    # tanh approximation (EUP-friendly); differs from exact at ~1e-3 level.
    c = math.sqrt(2.0 / math.pi)
    return 0.5 * x * (1.0 + jnp.tanh(c * (x + 0.044715 * x * x * x)))


def _make_kernel(approximate_gelu):
    gelu = _gelu_tanh if approximate_gelu else _gelu_exact

    def kernel(x_ref, w1_ref, b1_ref, w2_ref, b2_ref, o_ref):
        # MXU matmuls on bf16 inputs, f32 accumulation; elementwise in f32.
        h = jnp.dot(x_ref[...], w1_ref[...],
                    preferred_element_type=jnp.float32) + b1_ref[...]   # (tb, H)
        h = gelu(h)
        y = jnp.dot(h.astype(w2_ref.dtype), w2_ref[...],
                    preferred_element_type=jnp.float32) + b2_ref[...]   # (tb, O_pad)
        o_ref[...] = jax.nn.sigmoid(y).astype(o_ref.dtype)

    return kernel


def ffnn_observer_forward(u, w1, b1, w2, b2, *, batch_tile=128,
                          mxu_dtype=jnp.bfloat16, approximate_gelu=False):
    """u: (B, in_features, context_window).
    w1: (D, H), b1: (H,), w2: (H, O), b2: (O,)  (weights transposed vs torch)."""
    B = u.shape[0]
    x = u.reshape(B, -1)                               # == torch .flatten(1)
    D = x.shape[1]
    H = w1.shape[1]
    O = w2.shape[1]
    out_dtype = x.dtype

    # ---- lane-dense output: pad out_features to a multiple of 128 ----------
    O_pad = max(128, _round_up(O, 128))
    if O_pad != O:
        w2 = jnp.pad(w2, ((0, 0), (0, O_pad - O)))     # sigmoid(0)=0.5, sliced off
        b2 = jnp.pad(b2, (0, O_pad - O))

    # ---- batch tiling: large M tiles, pad B so the tile divides ------------
    tb = _round_up(min(batch_tile, _round_up(B, 16)), 16)   # 16 = bf16 sublane pack
    B_pad = _round_up(B, tb)
    if B_pad != B:
        x = jnp.pad(x, ((0, B_pad - B), (0, 0)))

    # ---- dtypes: MXU inputs bf16, biases / accumulation in f32 -------------
    x_mxu = x.astype(mxu_dtype)
    w1_mxu = w1.astype(mxu_dtype)
    w2_mxu = w2.astype(mxu_dtype)
    b1_2d = b1.astype(jnp.float32).reshape(1, H)
    b2_2d = b2.astype(jnp.float32).reshape(1, O_pad)

    # ---- VMEM budget (sized for v7x's 64 MiB, also fine on v5e/v6e) --------
    itemsize = jnp.dtype(mxu_dtype).itemsize
    weight_bytes = (D * H + H * O_pad) * itemsize
    bias_bytes = (H + O_pad) * 4
    io_tile_bytes = 2 * tb * D * itemsize + 2 * tb * O_pad * 4   # double-buffered tiles
    act_bytes = tb * H * 4 + tb * O_pad * 4
    vmem_limit = int(min(64 << 20,
                         max(32 << 20,
                             2 * weight_bytes + bias_bytes + io_tile_bytes
                             + act_bytes + (8 << 20))))
    # TODO(synk): for very large D (resident bf16 W1 > ~24 MiB, e.g. D >= 8k on
    # v7x) add a K-tiled reduction grid axis over D with a VMEM f32 accumulator
    # instead of keeping all of W1 resident.

    cost = pl.CostEstimate(
        flops=2 * B_pad * (D * H + H * O_pad),
        transcendentals=B_pad * (H + O_pad),
        bytes_accessed=(B_pad * D * itemsize + weight_bytes + bias_bytes
                        + B_pad * O_pad * 4),
    )

    kernel = _make_kernel(approximate_gelu)

    def build(weight_pipeline_mode):
        wkw = ({} if weight_pipeline_mode is None
               else {"pipeline_mode": weight_pipeline_mode})
        return pl.pallas_call(
            kernel,
            out_shape=jax.ShapeDtypeStruct((B_pad, O_pad), out_dtype),
            grid_spec=pltpu.PrefetchScalarGridSpec(
                num_scalar_prefetch=0,
                grid=(B_pad // tb,),
                in_specs=[
                    pl.BlockSpec((tb, D), lambda i: (i, 0)),            # x tile
                    pl.BlockSpec((D, H), lambda i: (0, 0), **wkw),      # W1 (resident)
                    pl.BlockSpec((1, H), lambda i: (0, 0), **wkw),      # b1
                    pl.BlockSpec((H, O_pad), lambda i: (0, 0), **wkw),  # W2 (resident)
                    pl.BlockSpec((1, O_pad), lambda i: (0, 0), **wkw),  # b2
                ],
                out_specs=pl.BlockSpec((tb, O_pad), lambda i: (i, 0)),
            ),
            compiler_params=pltpu.CompilerParams(
                dimension_semantics=("parallel",),
                vmem_limit_bytes=vmem_limit),
            cost_estimate=cost,
        )

    args = (x_mxu, w1_mxu, b1_2d, w2_mxu, b2_2d)
    try:
        # Single-buffer the grid-resident weights/biases (index_map is constant,
        # so extra buffers would only burn VMEM without hiding any DMA).
        out_pad = build(pl.Buffered(1))(*args)
    except Exception:
        # Fallback if this jax/Mosaic version rejects single buffering here;
        # default double-buffering is still correct, just uses more VMEM.
        out_pad = build(None)(*args)

    return out_pad[:B, :O]


def init_params(key, in_features, out_features, context_window):
    """Mirror torch.nn.Linear default init (uniform +-1/sqrt(fan_in)),
    weights stored transposed: (fan_in, fan_out)."""
    D = in_features * context_window
    H = D // 2
    k1, k2, k3, k4 = jax.random.split(key, 4)
    bound1 = 1.0 / math.sqrt(D)
    bound2 = 1.0 / math.sqrt(H)
    w1 = jax.random.uniform(k1, (D, H), jnp.float32, -bound1, bound1)
    b1 = jax.random.uniform(k2, (H,), jnp.float32, -bound1, bound1)
    w2 = jax.random.uniform(k3, (H, out_features), jnp.float32, -bound2, bound2)
    b2 = jax.random.uniform(k4, (out_features,), jnp.float32, -bound2, bound2)
    return w1, b1, w2, b2


def reference_forward(u, w1, b1, w2, b2):
    x = u.reshape(u.shape[0], -1)
    h = _gelu_exact(x @ w1 + b1)
    return jax.nn.sigmoid(h @ w2 + b2)


if __name__ == "__main__":
    # Small shapes consistent with the module:
    #   in_features=16, context_window=8 -> D=128, hidden=64; out_features=32.
    in_features, context_window, out_features = 16, 8, 32
    key = jax.random.PRNGKey(0)
    k_u, k_p = jax.random.split(key)
    w1, b1, w2, b2 = init_params(k_p, in_features, out_features, context_window)

    # Case 1: batch 8.
    B = 8
    u = jax.random.normal(k_u, (B, in_features, context_window), jnp.float32)
    out = jax.block_until_ready(ffnn_observer_forward(u, w1, b1, w2, b2))
    ref = reference_forward(u, w1, b1, w2, b2)
    assert out.shape == (B, out_features)
    # bf16 MXU inputs -> compare to the f32 reference with a loose tolerance.
    assert jnp.allclose(out, ref, atol=2e-2), float(jnp.max(jnp.abs(out - ref)))

    # Case 2: batch not a multiple of the tile (exercises the padding path).
    B2 = 5
    u2 = jax.random.normal(jax.random.PRNGKey(1),
                           (B2, in_features, context_window), jnp.float32)
    out2 = jax.block_until_ready(ffnn_observer_forward(u2, w1, b1, w2, b2))
    ref2 = reference_forward(u2, w1, b1, w2, b2)
    assert out2.shape == (B2, out_features)
    assert jnp.allclose(out2, ref2, atol=2e-2), float(jnp.max(jnp.abs(out2 - ref2)))

    print("KERNEL_OK")
</pallas_src>

<mosaic_0001>
module attributes {stable_mosaic.version = 11 : i64} {
  func.func @kernel(%arg0: i32, %arg1: memref<16x128xbf16, #tpu.memory_space<vmem>>, %arg2: memref<128x64xbf16, #tpu.memory_space<vmem>>, %arg3: memref<1x64xf32, #tpu.memory_space<vmem>>, %arg4: memref<64x128xbf16, #tpu.memory_space<vmem>>, %arg5: memref<1x128xf32, #tpu.memory_space<vmem>>, %arg6: memref<16x128xf32, #tpu.memory_space<vmem>>) attributes {dimension_semantics = [#tpu.dimension_semantics<parallel>], iteration_bounds = array<i64: 1>, scalar_prefetch = 0 : i64, scratch_operands = 0 : i64, tpu.core_type = #tpu.core_type<tc>, window_params = [{transform_indices = @transform_0, window_bounds = array<i64: 16, 128>}, {pipeline_mode = #tpu.pipeline_mode<synchronous>, transform_indices = @transform_1, window_bounds = array<i64: 128, 64>}, {pipeline_mode = #tpu.pipeline_mode<synchronous>, transform_indices = @transform_2, window_bounds = array<i64: 1, 64>}, {pipeline_mode = #tpu.pipeline_mode<synchronous>, transform_indices = @transform_3, window_bounds = array<i64: 64, 128>}, {pipeline_mode = #tpu.pipeline_mode<synchronous>, transform_indices = @transform_4, window_bounds = array<i64: 1, 128>}, {transform_indices = @transform_5, window_bounds = array<i64: 16, 128>}]} {
    %c0 = arith.constant 0 : index
    %c0_0 = arith.constant 0 : index
    %0 = vector.load %arg1[%c0, %c0_0] : memref<16x128xbf16, #tpu.memory_space<vmem>>, vector<16x128xbf16>
    %c0_1 = arith.constant 0 : index
    %c0_2 = arith.constant 0 : index
    %1 = vector.load %arg2[%c0_1, %c0_2] : memref<128x64xbf16, #tpu.memory_space<vmem>>, vector<128x64xbf16>
    %cst = arith.constant dense<0.000000e+00> : vector<16x64xf32>
    %2 = tpu.matmul %0, %1, %cst {dimension_numbers = #tpu.dot_dimension_numbers<[1], [0], [0], [1], [0, 0, 1, 1], [], []>} : vector<16x128xbf16>, vector<128x64xbf16>, vector<16x64xf32> -> vector<16x64xf32>
    %c0_3 = arith.constant 0 : index
    %c0_4 = arith.constant 0 : index
    %3 = vector.load %arg3[%c0_3, %c0_4] : memref<1x64xf32, #tpu.memory_space<vmem>>, vector<1x64xf32>
    %4 = vector.broadcast %3 : vector<1x64xf32> to vector<16x64xf32>
    %5 = arith.addf %2, %4 : vector<16x64xf32>
    %cst_5 = arith.constant 5.000000e-01 : f32
    %6 = vector.broadcast %cst_5 : f32 to vector<16x64xf32>
    %7 = arith.mulf %6, %5 : vector<16x64xf32>
    %cst_6 = arith.constant 0.707106769 : f32
    %8 = vector.broadcast %cst_6 : f32 to vector<16x64xf32>
    %9 = arith.mulf %5, %8 : vector<16x64xf32>
    %10 = math.erf %9 : vector<16x64xf32>
    %cst_7 = arith.constant 1.000000e+00 : f32
    %11 = vector.broadcast %cst_7 : f32 to vector<16x64xf32>
    %12 = arith.addf %11, %10 : vector<16x64xf32>
    %13 = arith.mulf %7, %12 : vector<16x64xf32>
    %14 = arith.truncf %13 : vector<16x64xf32> to vector<16x64xbf16>
    %c0_8 = arith.constant 0 : index
    %c0_9 = arith.constant 0 : index
    %15 = vector.load %arg4[%c0_8, %c0_9] : memref<64x128xbf16, #tpu.memory_space<vmem>>, vector<64x128xbf16>
    %cst_10 = arith.constant dense<0.000000e+00> : vector<16x128xf32>
    %16 = tpu.matmul %14, %15, %cst_10 {dimension_numbers = #tpu.dot_dimension_numbers<[1], [0], [0], [1], [0, 0, 1, 1], [], []>} : vector<16x64xbf16>, vector<64x128xbf16>, vector<16x128xf32> -> vector<16x128xf32>
    %c0_11 = arith.constant 0 : index
    %c0_12 = arith.constant 0 : index
    %17 = vector.load %arg5[%c0_11, %c0_12] : memref<1x128xf32, #tpu.memory_space<vmem>>, vector<1x128xf32>
    %18 = vector.broadcast %17 : vector<1x128xf32> to vector<16x128xf32>
    %19 = arith.addf %16, %18 : vector<16x128xf32>
    %20 = arith.negf %19 : vector<16x128xf32>
    %21 = math.exp %20 : vector<16x128xf32>
    %cst_13 = arith.constant 1.000000e+00 : f32
    %22 = vector.broadcast %cst_13 : f32 to vector<16x128xf32>
    %23 = arith.addf %22, %21 : vector<16x128xf32>
    %24 = arith.divf %22, %23 : vector<16x128xf32>
    %c0_14 = arith.constant 0 : index
    %c0_15 = arith.constant 0 : index
    %25 = vector.load %arg6[%c0_14, %c0_15] : memref<16x128xf32, #tpu.memory_space<vmem>>, vector<16x128xf32>
    tpu.vector_store %arg6[%c0_14, %c0_15], %24 {strides = array<i32>} : memref<16x128xf32, #tpu.memory_space<vmem>>, vector<16x128xf32>,
    return
  }
  func.func @transform_0(%arg0: i32) -> (i32, i32) {
    %c0_i32 = arith.constant 0 : i32
    %c0_i32_0 = arith.constant 0 : i32
    return %arg0, %c0_i32 : i32, i32
  }
  func.func @transform_1(%arg0: i32) -> (i32, i32) {
    %c0_i32 = arith.constant 0 : i32
    %c0_i32_0 = arith.constant 0 : i32
    %c0_i32_1 = arith.constant 0 : i32
    return %c0_i32, %c0_i32_0 : i32, i32
  }
  func.func @transform_2(%arg0: i32) -> (i32, i32) {
    %c0_i32 = arith.constant 0 : i32
    %c0_i32_0 = arith.constant 0 : i32
    %c0_i32_1 = arith.constant 0 : i32
    return %c0_i32, %c0_i32_0 : i32, i32
  }
  func.func @transform_3(%arg0: i32) -> (i32, i32) {
    %c0_i32 = arith.constant 0 : i32
    %c0_i32_0 = arith.constant 0 : i32
    %c0_i32_1 = arith.constant 0 : i32
    return %c0_i32, %c0_i32_0 : i32, i32
  }
  func.func @transform_4(%arg0: i32) -> (i32, i32) {
    %c0_i32 = arith.constant 0 : i32
    %c0_i32_0 = arith.constant 0 : i32
    %c0_i32_1 = arith.constant 0 : i32
    return %c0_i32, %c0_i32_0 : i32, i32
  }
  func.func @transform_5(%arg0: i32) -> (i32, i32) {
    %c0_i32 = arith.constant 0 : i32
    %c0_i32_0 = arith.constant 0 : i32
    return %arg0, %c0_i32 : i32, i32
  }
}

module attributes {stable_mosaic.version = 11 : i64} {
  func.func @kernel(%arg0: i32, %arg1: memref<16x128xbf16, #tpu.memory_space<vmem>>, %arg2: memref<128x64xbf16, #tpu.memory_space<vmem>>, %arg3: memref<1x64xf32, #tpu.memory_space<vmem>>, %arg4: memref<64x128xbf16, #tpu.memory_space<vmem>>, %arg5: memref<1x128xf32, #tpu.memory_space<vmem>>, %arg6: memref<16x128xf32, #tpu.memory_space<vmem>>) attributes {dimension_semantics = [#tpu.dimension_semantics<parallel>], iteration_bounds = array<i64: 1>, scalar_prefetch = 0 : i64, scratch_operands = 0 : i64, tpu.core_type = #tpu.core_type<tc>, window_params = [{transform_indices = @transform_0, window_bounds = array<i64: 16, 128>}, {pipeline_mode = #tpu.pipeline_mode<synchronous>, transform_indices = @transform_1, window_bounds = array<i64: 128, 64>}, {pipeline_mode = #tpu.pipeline_mode<synchronous>, transform_indices = @transform_2, window_bounds = array<i64: 1, 64>}, {pipeline_mode = #tpu.pipeline_mode<synchronous>, transform_indices = @transform_3, window_bounds = array<i64: 64, 128>}, {pipeline_mode = #tpu.pipeline_mode<synchronous>, transform_indices = @transform_4, window_bounds = array<i64: 1, 128>}, {transform_indices = @transform_5, window_bounds = array<i64: 16, 128>}]} {
    %c0 = arith.constant 0 : index
    %c0_0 = arith.constant 0 : index
    %0 = vector.load %arg1[%c0, %c0_0] : memref<16x128xbf16, #tpu.memory_space<vmem>>, vector<16x128xbf16>
    %c0_1 = arith.constant 0 : index
    %c0_2 = arith.constant 0 : index
    %1 = vector.load %arg2[%c0_1, %c0_2] : memref<128x64xbf16, #tpu.memory_space<vmem>>, vector<128x64xbf16>
    %cst = arith.constant dense<0.000000e+00> : vector<16x64xf32>
    %2 = tpu.matmul %0, %1, %cst {dimension_numbers = #tpu.dot_dimension_numbers<[1], [0], [0], [1], [0, 0, 1, 1], [], []>} : vector<16x128xbf16>, vector<128x64xbf16>, vector<16x64xf32> -> vector<16x64xf32>
    %c0_3 = arith.constant 0 : index
    %c0_4 = arith.constant 0 : index
    %3 = vector.load %arg3[%c0_3, %c0_4] : memref<1x64xf32, #tpu.memory_space<vmem>>, vector<1x64xf32>
    %4 = vector.broadcast %3 : vector<1x64xf32> to vector<16x64xf32>
    %5 = arith.addf %2, %4 : vector<16x64xf32>
    %cst_5 = arith.constant 5.000000e-01 : f32
    %6 = vector.broadcast %cst_5 : f32 to vector<16x64xf32>
    %7 = arith.mulf %6, %5 : vector<16x64xf32>
    %cst_6 = arith.constant 0.707106769 : f32
    %8 = vector.broadcast %cst_6 : f32 to vector<16x64xf32>
    %9 = arith.mulf %5, %8 : vector<16x64xf32>
    %10 = math.erf %9 : vector<16x64xf32>
    %cst_7 = arith.constant 1.000000e+00 : f32
    %11 = vector.broadcast %cst_7 : f32 to vector<16x64xf32>
    %12 = arith.addf %11, %10 : vector<16x64xf32>
    %13 = arith.mulf %7, %12 : vector<16x64xf32>
    %14 = arith.truncf %13 : vector<16x64xf32> to vector<16x64xbf16>
    %c0_8 = arith.constant 0 : index
    %c0_9 = arith.constant 0 : index
    %15 = vector.load %arg4[%c0_8, %c0_9] : memref<64x128xbf16, #tpu.memory_space<vmem>>, vector<64x128xbf16>
    %cst_10 = arith.constant dense<0.000000e+00> : vector<16x128xf32>
    %16 = tpu.matmul %14, %15, %cst_10 {dimension_numbers = #tpu.dot_dimension_numbers<[1], [0], [0], [1], [0, 0, 1, 1], [], []>} : vector<16x64xbf16>, vector<64x128xbf16>, vector<16x128xf32> -> vector<16x128xf32>
    %c0_11 = arith.constant 0 : index
    %c0_12 = arith.constant 0 : index
    %17 = vector.load %arg5[%c0_11, %c0_12] : memref<1x128xf32, #tpu.memory_space<vmem>>, vector<1x128xf32>
    %18 = vector.broadcast %17 : vector<1x128xf32> to vector<16x128xf32>
    %19 = arith.addf %16, %18 : vector<16x128xf32>
    %20 = arith.negf %19 : vector<16x128xf32>
    %21 = math.exp %20 : vector<16x128xf32>
    %cst_13 = arith.constant 1.000000e+00 : f32
    %22 = vector.broadcast %cst_13 : f32 to vector<16x128xf32>
    %23 = arith.addf %22, %21 : vector<16x128xf32>
    %24 = arith.divf %22, %23 : vector<16x128xf32>
    %c0_14 = arith.constant 0 : index
    %c0_15 = arith.constant 0 : index
    %25 = vector.load %arg6[%c0_14, %c0_15] : memref<16x128xf32, #tpu.memory_space<vmem>>, vector<16x128xf32>
    tpu.vector_store %arg6[%c0_14, %c0_15], %24 {strides = array<i32>} : memref<16x128xf32, #tpu.memory_space<vmem>>, vector<16x128xf32>,
    return
  }
  func.func @transform_0(%arg0: i32) -> (i32, i32) {
    %c0_i32 = arith.constant 0 : i32
    %c0_i32_0 = arith.constant 0 : i32
    return %arg0, %c0_i32 : i32, i32
  }
  func.func @transform_1(%arg0: i32) -> (i32, i32) {
    %c0_i32 = arith.constant 0 : i32
    %c0_i32_0 = arith.constant 0 : i32
    %c0_i32_1 = arith.constant 0 : i32
    return %c0_i32, %c0_i32_0 : i32, i32
  }
  func.func @transform_2(%arg0: i32) -> (i32, i32) {
    %c0_i32 = arith.constant 0 : i32
    %c0_i32_0 = arith.constant 0 : i32
    %c0_i32_1 = arith.constant 0 : i32
    return %c0_i32, %c0_i32_0 : i32, i32
  }
  func.func @transform_3(%arg0: i32) -> (i32, i32) {
    %c0_i32 = arith.constant 0 : i32
    %c0_i32_0 = arith.constant 0 : i32
    %c0_i32_1 = arith.constant 0 : i32
    return %c0_i32, %c0_i32_0 : i32, i32
  }
  func.func @transform_4(%arg0: i32) -> (i32, i32) {
    %c0_i32 = arith.constant 0 : i32
    %c0_i32_0 = arith.constant 0 : i32
    %c0_i32_1 = arith.constant 0 : i32
    return %c0_i32, %c0_i32_0 : i32, i32
  }
  func.func @transform_5(%arg0: i32) -> (i32, i32) {
    %c0_i32 = arith.constant 0 : i32
    %c0_i32_0 = arith.constant 0 : i32
    return %arg0, %c0_i32 : i32, i32
  }
}

</mosaic_0001>

<llo_original>
// kernel: tpu_custom_call.1
$region0: #{tpu_custom_call.1}
  #allocation0 [shape = 'u32[]', space=smem, size = 0x4, offset = 0x4, fixed_abs, tag = 'smem constant byte address 0x4 - core index']
  #allocation1 [shape = 'u32[144,128]{1,0:T(1,128)}', space=vmem, size = 0x12000, scoped, tag = 'internal scratch']
  %s0 = inlined_call_operand.vmem [shape: bf16[16,128], index: 0, kind: input, shape index: {}]
  %s1 = inlined_call_operand.vmem [shape: bf16[128,64], index: 1, kind: input, shape index: {}]
  %s2 = inlined_call_operand.vmem [shape: f32[1,64], index: 2, kind: input, shape index: {}]
  %s3 = inlined_call_operand.vmem [shape: bf16[64,128], index: 3, kind: input, shape index: {}]
  %s4 = inlined_call_operand.vmem [shape: f32[1,128], index: 4, kind: input, shape index: {}]
  %s5 = inlined_call_operand.hbm [shape: f32[16,128], index: 5, kind: output, shape index: {}]
  %s6 = sld [smem:[#allocation0]]
  $region30: #{tpu_custom_call.1} parent=0
    _
  %s8 = ssub.s32 1, %s6
  %s9 = scalar_select 0, %s8, %s6
  $region1: #{tpu_custom_call.1} parent=0
    #allocation2 [shape = 'u8[8192]{0}', space=vmem, size = 0x2000, scoped, tag = 'output window, operand 0, single buffered']
    #allocation3 [shape = 's32[1]{0}', space=sflag, size = 0x4, scoped, tag = 'scoped memory for tpu_custom_call.1']
    %10 = vsyncpa [#allocation3], 0
    // Predicated region
    $region2: #{tpu_custom_call.1} parent=1 // pred_check
      _
    $region3: #{tpu_custom_call.1} parent=1 // pred_check_branch
      %12 = sbr.rel (0) target = $region5
    $region4: #{tpu_custom_call.1} parent=1 // pred_region
      _
    $region5: #{tpu_custom_call.1} parent=1 // pred_fallthru
      _
    // Predicated region
    $region6: #{tpu_custom_call.1} parent=1 // pred_check
      _
    $region7: #{tpu_custom_call.1} parent=1 // pred_check_branch
      %14 = sbr.rel (0) target = $region9
    $region8: #{tpu_custom_call.1} parent=1 // pred_region
      _
    $region9: #{tpu_custom_call.1} parent=1 // pred_fallthru
      _
    // Predicated region
    $region10: #{tpu_custom_call.1} parent=1 // pred_check
      _
    $region11: #{tpu_custom_call.1} parent=1 // pred_check_branch
      %16 = sbr.rel (0) target = $region13
    $region12: #{tpu_custom_call.1} parent=1 // pred_region
      _
    $region13: #{tpu_custom_call.1} parent=1 // pred_fallthru
      _
    // Predicated region
    $region14: #{tpu_custom_call.1} parent=1 // pred_check
      _
    $region15: #{tpu_custom_call.1} parent=1 // pred_check_branch
      %18 = sbr.rel (0) target = $region17
    $region16: #{tpu_custom_call.1} parent=1 // pred_region
      _
    $region17: #{tpu_custom_call.1} parent=1 // pred_fallthru
      _
    // Predicated region
    $region18: #{tpu_custom_call.1} parent=1 // pred_check
      _
    $region19: #{tpu_custom_call.1} parent=1 // pred_check_branch
      %20 = sbr.rel (0) target = $region21
    $region20: #{tpu_custom_call.1} parent=1 // pred_region
      _
    $region21: #{tpu_custom_call.1} parent=1 // pred_fallthru
      _
    %v22 = vld [vmem:[%s0] sm:$0xf]
    %v23 = vld [vmem:[%s0 + $0x4] sm:$0xf]
    %v24 = vld [vmem:[%s1] sm:$0xf]
    %v25 = vld [vmem:[%s1 + $0x4] sm:$0xf]
    %v26 = vld [vmem:[%s1 + $0x8] sm:$0xf]
    %v27 = vld [vmem:[%s1 + $0xc] sm:$0xf]
    %v28 = vld [vmem:[%s1 + $0x10] sm:$0xf]
    %v29 = vld [vmem:[%s1 + $0x14] sm:$0xf]
    %v30 = vld [vmem:[%s1 + $0x18] sm:$0xf]
    %v31 = vld [vmem:[%s1 + $0x1c] sm:$0xf]
    %v32 = vld [vmem:[%s1 + $0x20] sm:$0xf]
    %v33 = vld [vmem:[%s1 + $0x24] sm:$0xf]
    %v34 = vld [vmem:[%s1 + $0x28] sm:$0xf]
    %v35 = vld [vmem:[%s1 + $0x2c] sm:$0xf]
    %v36 = vld [vmem:[%s1 + $0x30] sm:$0xf]
    %v37 = vld [vmem:[%s1 + $0x34] sm:$0xf]
    %v38 = vld [vmem:[%s1 + $0x38] sm:$0xf]
    %v39 = vld [vmem:[%s1 + $0x3c] sm:$0xf]
    %v40 = vld [vmem:[%s2] sm:$0x1]
    %v42 = vlaneseq
    %v43 = vshrl.u32 %v42, 7
    %v44 = vsub.s32 0, %v43
    %v45 = vrot.slane %v40, %v44
    %v49 = vunpack.c.l.b16 %v22
    %v50 = vunpack.c.l.b16 %v23
    %v51 = vpack.c.b16 %v50, %v49
    %v69 = vunpack.c.l.b16 %v24
    %v70 = vunpack.c.l.b16 %v25
    %v71 = vunpack.c.l.b16 %v26
    %v72 = vunpack.c.l.b16 %v27
    %v73 = vunpack.c.l.b16 %v28
    %v74 = vunpack.c.l.b16 %v29
    %v75 = vunpack.c.l.b16 %v30
    %v76 = vunpack.c.l.b16 %v31
    %v77 = vunpack.c.l.b16 %v32
    %v78 = vunpack.c.l.b16 %v33
    %v79 = vunpack.c.l.b16 %v34
    %v80 = vunpack.c.l.b16 %v35
    %v81 = vunpack.c.l.b16 %v36
    %v82 = vunpack.c.l.b16 %v37
    %v83 = vunpack.c.l.b16 %v38
    %v84 = vunpack.c.l.b16 %v39
    %v85 = vpack.c.b16 %v70, %v69
    %v86 = vpack.c.b16 %v72, %v71
    %v87 = vpack.c.b16 %v74, %v73
    %v88 = vpack.c.b16 %v76, %v75
    %v89 = vpack.c.b16 %v78, %v77
    %v90 = vpack.c.b16 %v80, %v79
    %v91 = vpack.c.b16 %v82, %v81
    %v92 = vpack.c.b16 %v84, %v83
    %101 = vmatprep.subr.bf16.mxu0 0
    %102 = vmatpush1.bf16.msra.mxu0 %v92
    %103 = vmatprep.subr.bf16.mxu0 0
    %104 = vmatpush1.bf16.msra.mxu0 %v91
    %105 = vmatprep.subr.bf16.mxu0 0
    %106 = vmatpush1.bf16.msra.mxu0 %v90
    %107 = vmatprep.subr.bf16.mxu0 0
    %108 = vmatpush1.bf16.msra.mxu0 %v89
    %109 = vmatprep.subr.bf16.mxu0 0
    %110 = vmatpush1.bf16.msra.mxu0 %v88
    %111 = vmatprep.subr.bf16.mxu0 0
    %112 = vmatpush1.bf16.msra.mxu0 %v87
    %113 = vmatprep.subr.bf16.mxu0 0
    %114 = vmatpush1.bf16.msra.mxu0 %v86
    %115 = vmatprep.subr.bf16.mxu0 0
    %116 = vmatpush1.bf16.msra.mxu0 %v85
    %117 = vmatprep.subr.bf16.mxu0 0
    %118 = vmatpush2.bf16.msra.mxu0 0
    %119 = vmatprep.subr.bf16.mxu0 0
    %120 = vmatpush2.bf16.msra.mxu0 0
    %121 = vmatprep.subr.bf16.mxu0 0
    %122 = vmatpush2.bf16.msra.mxu0 0
    %123 = vmatprep.subr.bf16.mxu0 0
    %124 = vmatpush2.bf16.msra.mxu0 0
    %125 = vmatprep.subr.bf16.mxu0 0
    %126 = vmatpush2.bf16.msra.mxu0 0
    %127 = vmatprep.subr.bf16.mxu0 0
    %128 = vmatpush2.bf16.msra.mxu0 0
    %129 = vmatprep.subr.bf16.mxu0 0
    %130 = vmatpush2.bf16.msra.mxu0 0
    %131 = vmatprep.subr.bf16.mxu0 0
    %132 = vmatpush2.bf16.msra.mxu0 0
    %133 = vmatprep.mubr.bf16.mxu0 0
    %134 = vmatmul.mubr.bf16.gmra.mxu0 %v51
    %v135 = vpop.f32.mrf.mxu0
    %v136 = vadd.f32 %v45, %v135
    %v137 = vpop.f32.mrf.mxu0
    %v138 = vpop.f32.mrf.mxu0
    %v139 = vadd.f32 %v45, %v138
    %v140 = vpop.f32.mrf.mxu0
    %141 = vdwg.mxu0
    %v142 = vmul.f32 %v136, 0.5
    %v143 = vmul.f32 %v139, 0.5
    %v144 = vmul.f32 %v136, 0.70710677
    %v145 = vmul.f32 %v139, 0.70710677
    %v146 = verf.f32.pop %v144
    %v147 = verf.f32.pop %v145
    %v148 = vadd.f32 %v146, 1.0
    %v149 = vadd.f32 %v147, 1.0
    %v150 = vmul.f32 %v142, %v148
    %v151 = vmul.f32 %v143, %v149
    %v152 = vpack.c.bf16 %v151, %v150
    %v153 = vld [vmem:[%s3] sm:$0xf]
    %v154 = vld [vmem:[%s3 + $0x4] sm:$0xf]
    %v155 = vld [vmem:[%s3 + $0x8] sm:$0xf]
    %v156 = vld [vmem:[%s3 + $0xc] sm:$0xf]
    %v157 = vld [vmem:[%s3 + $0x10] sm:$0xf]
    %v158 = vld [vmem:[%s3 + $0x14] sm:$0xf]
    %v159 = vld [vmem:[%s3 + $0x18] sm:$0xf]
    %v160 = vld [vmem:[%s3 + $0x1c] sm:$0xf]
    %v161 = vld [vmem:[%s4] sm:$0x1]
    %v163 = vlaneseq
    %v164 = vshrl.u32 %v163, 7
    %v165 = vsub.s32 0, %v164
    %v166 = vrot.slane %v161, %v165
    %v176 = vunpack.c.l.b16 %v153
    %v177 = vunpack.c.l.b16 %v154
    %v178 = vunpack.c.l.b16 %v155
    %v179 = vunpack.c.l.b16 %v156
    %v180 = vunpack.c.l.b16 %v157
    %v181 = vunpack.c.l.b16 %v158
    %v182 = vunpack.c.l.b16 %v159
    %v183 = vunpack.c.l.b16 %v160
    %v184 = vpack.c.b16 %v177, %v176
    %v185 = vpack.c.b16 %v179, %v178
    %v186 = vpack.c.b16 %v181, %v180
    %v187 = vpack.c.b16 %v183, %v182
    %vm192 = vcmask 523264
    %v194 = vsel %vm192, %v152, 0
    %196 = vmatprep.subr.bf16.mxu0 0
    %197 = vmatpush1.bf16.msra.mxu0 0
    %198 = vmatprep.subr.bf16.mxu0 0
    %199 = vmatpush1.bf16.msra.mxu0 0
    %200 = vmatprep.subr.bf16.mxu0 0
    %201 = vmatpush1.bf16.msra.mxu0 0
    %202 = vmatprep.subr.bf16.mxu0 0
    %203 = vmatpush1.bf16.msra.mxu0 0
    %204 = vmatprep.subr.bf16.mxu0 0
    %205 = vmatpush1.bf16.msra.mxu0 %v187
    %206 = vmatprep.subr.bf16.mxu0 0
    %207 = vmatpush1.bf16.msra.mxu0 %v186
    %208 = vmatprep.subr.bf16.mxu0 0
    %209 = vmatpush1.bf16.msra.mxu0 %v185
    %210 = vmatprep.subr.bf16.mxu0 0
    %211 = vmatpush1.bf16.msra.mxu0 %v184
    %212 = vmatprep.subr.bf16.mxu0 0
    %213 = vmatpush2.bf16.msra.mxu0 0
    %214 = vmatprep.subr.bf16.mxu0 0
    %215 = vmatpush2.bf16.msra.mxu0 0
    %216 = vmatprep.subr.bf16.mxu0 0
    %217 = vmatpush2.bf16.msra.mxu0 0
    %218 = vmatprep.subr.bf16.mxu0 0
    %219 = vmatpush2.bf16.msra.mxu0 0
    %220 = vmatprep.subr.bf16.mxu0 0
    %221 = vmatpush2.bf16.msra.mxu0 0
    %222 = vmatprep.subr.bf16.mxu0 0
    %223 = vmatpush2.bf16.msra.mxu0 0
    %224 = vmatprep.subr.bf16.mxu0 0
    %225 = vmatpush2.bf16.msra.mxu0 0
    %226 = vmatprep.subr.bf16.mxu0 0
    %227 = vmatpush2.bf16.msra.mxu0 0
    %228 = vmatprep.mubr.bf16.mxu0 0
    %229 = vmatmul.mubr.bf16.gmra.mxu0 %v194
    %v230 = vpop.f32.mrf.mxu0
    %v231 = vadd.f32 %v166, %v230
    %v232 = vpop.f32.mrf.mxu0
    %v233 = vpop.f32.mrf.mxu0
    %v234 = vadd.f32 %v166, %v233
    %v235 = vpop.f32.mrf.mxu0
    %236 = vdwg.mxu0
    %v237 = vxor.u32 %v231, 2147483648
    %v238 = vxor.u32 %v234, 2147483648
    %v239 = vmul.f32 %v237, 1.442695
    %v240 = vpow.pop %v239
    %v241 = vmul.f32 %v238, 1.442695
    %v242 = vpow.pop %v241
    %v243 = vadd.f32 %v240, 1.0
    %v244 = vadd.f32 %v242, 1.0
    %v245 = vrcp.pop %v243
    %v246 = vmul.f32 1.0, %v245
    %v247 = vrcp.pop %v244
    %v248 = vmul.f32 1.0, %v247
    %249 = vst [vmem:[#allocation2] sm:$0xff] %v246
    %250 = vst [vmem:[#allocation2 + $0x8] sm:$0xff] %v248
    // Predicated region
    $region22: #{tpu_custom_call.1} parent=1 // pred_check
      _
    $region23: #{tpu_custom_call.1} parent=1 // pred_check_branch
      %252 = sbr.rel (0) target = $region25
    $region24: #{tpu_custom_call.1} parent=1 // pred_region
      %s254 = ssub.s32 256, 256
      %255 = vsyncadd [#allocation3], %s254
      %s256 = sshll.u32 [#allocation2], 4
      %s257 = int_to_ptr.vmem [resolvable:$true] %s256
      %262 = dma.vmem_to_hbm [thread:$0]  %s257, 256, %s5, [#allocation3], 128, 128, 8
    $region25: #{tpu_custom_call.1} parent=1 // pred_fallthru
      _
    // Predicated region
    $region26: #{tpu_custom_call.1} parent=1 // pred_check
      _
    $region27: #{tpu_custom_call.1} parent=1 // pred_check_branch
      %264 = sbr.rel (0) target = $region29
    $region28: #{tpu_custom_call.1} parent=1 // pred_region
      %265 = dma.done [#allocation3], 256
    $region29: #{tpu_custom_call.1} parent=1 // pred_fallthru
      _
    %266 = vsyncpa [#allocation3], 1

// kernel: tpu_custom_call.1
$region0: #{tpu_custom_call.1}
  #allocation0 [shape = 'u32[]', space=smem, size = 0x4, offset = 0x4, fixed_abs, tag = 'smem constant byte address 0x4 - core index']
  #allocation1 [shape = 'u32[144,128]{1,0:T(1,128)}', space=vmem, size = 0x12000, scoped, tag = 'internal scratch']
  %s0 = inlined_call_operand.vmem [shape: bf16[16,128], index: 0, kind: input, shape index: {}]
  %s1 = inlined_call_operand.vmem [shape: bf16[128,64], index: 1, kind: input, shape index: {}]
  %s2 = inlined_call_operand.vmem [shape: f32[1,64], index: 2, kind: input, shape index: {}]
  %s3 = inlined_call_operand.vmem [shape: bf16[64,128], index: 3, kind: input, shape index: {}]
  %s4 = inlined_call_operand.vmem [shape: f32[1,128], index: 4, kind: input, shape index: {}]
  %s5 = inlined_call_operand.hbm [shape: f32[16,128], index: 5, kind: output, shape index: {}]
  %s6 = sld [smem:[#allocation0]]
  $region30: #{tpu_custom_call.1} parent=0
    _
  %s8 = ssub.s32 1, %s6
  %s9 = scalar_select 0, %s8, %s6
  $region1: #{tpu_custom_call.1} parent=0
    #allocation2 [shape = 'u8[8192]{0}', space=vmem, size = 0x2000, scoped, tag = 'output window, operand 0, single buffered']
    #allocation3 [shape = 's32[1]{0}', space=sflag, size = 0x4, scoped, tag = 'scoped memory for tpu_custom_call.1']
    %10 = vsyncpa [#allocation3], 0
    // Predicated region
    $region2: #{tpu_custom_call.1} parent=1 // pred_check
      _
    $region3: #{tpu_custom_call.1} parent=1 // pred_check_branch
      %12 = sbr.rel (0) target = $region5
    $region4: #{tpu_custom_call.1} parent=1 // pred_region
      _
    $region5: #{tpu_custom_call.1} parent=1 // pred_fallthru
      _
    // Predicated region
    $region6: #{tpu_custom_call.1} parent=1 // pred_check
      _
    $region7: #{tpu_custom_call.1} parent=1 // pred_check_branch
      %14 = sbr.rel (0) target = $region9
    $region8: #{tpu_custom_call.1} parent=1 // pred_region
      _
    $region9: #{tpu_custom_call.1} parent=1 // pred_fallthru
      _
    // Predicated region
    $region10: #{tpu_custom_call.1} parent=1 // pred_check
      _
    $region11: #{tpu_custom_call.1} parent=1 // pred_check_branch
      %16 = sbr.rel (0) target = $region13
    $region12: #{tpu_custom_call.1} parent=1 // pred_region
      _
    $region13: #{tpu_custom_call.1} parent=1 // pred_fallthru
      _
    // Predicated region
    $region14: #{tpu_custom_call.1} parent=1 // pred_check
      _
    $region15: #{tpu_custom_call.1} parent=1 // pred_check_branch
      %18 = sbr.rel (0) target = $region17
    $region16: #{tpu_custom_call.1} parent=1 // pred_region
      _
    $region17: #{tpu_custom_call.1} parent=1 // pred_fallthru
      _
    // Predicated region
    $region18: #{tpu_custom_call.1} parent=1 // pred_check
      _
    $region19: #{tpu_custom_call.1} parent=1 // pred_check_branch
      %20 = sbr.rel (0) target = $region21
    $region20: #{tpu_custom_call.1} parent=1 // pred_region
      _
    $region21: #{tpu_custom_call.1} parent=1 // pred_fallthru
      _
    %v22 = vld [vmem:[%s0] sm:$0xf]
    %v23 = vld [vmem:[%s0 + $0x4] sm:$0xf]
    %v24 = vld [vmem:[%s1] sm:$0xf]
    %v25 = vld [vmem:[%s1 + $0x4] sm:$0xf]
    %v26 = vld [vmem:[%s1 + $0x8] sm:$0xf]
    %v27 = vld [vmem:[%s1 + $0xc] sm:$0xf]
    %v28 = vld [vmem:[%s1 + $0x10] sm:$0xf]
    %v29 = vld [vmem:[%s1 + $0x14] sm:$0xf]
    %v30 = vld [vmem:[%s1 + $0x18] sm:$0xf]
    %v31 = vld [vmem:[%s1 + $0x1c] sm:$0xf]
    %v32 = vld [vmem:[%s1 + $0x20] sm:$0xf]
    %v33 = vld [vmem:[%s1 + $0x24] sm:$0xf]
    %v34 = vld [vmem:[%s1 + $0x28] sm:$0xf]
    %v35 = vld [vmem:[%s1 + $0x2c] sm:$0xf]
    %v36 = vld [vmem:[%s1 + $0x30] sm:$0xf]
    %v37 = vld [vmem:[%s1 + $0x34] sm:$0xf]
    %v38 = vld [vmem:[%s1 + $0x38] sm:$0xf]
    %v39 = vld [vmem:[%s1 + $0x3c] sm:$0xf]
    %v40 = vld [vmem:[%s2] sm:$0x1]
    %v42 = vlaneseq
    %v43 = vshrl.u32 %v42, 7
    %v44 = vsub.s32 0, %v43
    %v45 = vrot.slane %v40, %v44
    %v49 = vunpack.c.l.b16 %v22
    %v50 = vunpack.c.l.b16 %v23
    %v51 = vpack.c.b16 %v50, %v49
    %v69 = vunpack.c.l.b16 %v24
    %v70 = vunpack.c.l.b16 %v25
    %v71 = vunpack.c.l.b16 %v26
    %v72 = vunpack.c.l.b16 %v27
    %v73 = vunpack.c.l.b16 %v28
    %v74 = vunpack.c.l.b16 %v29
    %v75 = vunpack.c.l.b16 %v30
    %v76 = vunpack.c.l.b16 %v31
    %v77 = vunpack.c.l.b16 %v32
    %v78 = vunpack.c.l.b16 %v33
    %v79 = vunpack.c.l.b16 %v34
    %v80 = vunpack.c.l.b16 %v35
    %v81 = vunpack.c.l.b16 %v36
    %v82 = vunpack.c.l.b16 %v37
    %v83 = vunpack.c.l.b16 %v38
    %v84 = vunpack.c.l.b16 %v39
    %v85 = vpack.c.b16 %v70, %v69
    %v86 = vpack.c.b16 %v72, %v71
    %v87 = vpack.c.b16 %v74, %v73
    %v88 = vpack.c.b16 %v76, %v75
    %v89 = vpack.c.b16 %v78, %v77
    %v90 = vpack.c.b16 %v80, %v79
    %v91 = vpack.c.b16 %v82, %v81
    %v92 = vpack.c.b16 %v84, %v83
    %101 = vmatprep.subr.bf16.mxu0 0
    %102 = vmatpush1.bf16.msra.mxu0 %v92
    %103 = vmatprep.subr.bf16.mxu0 0
    %104 = vmatpush1.bf16.msra.mxu0 %v91
    %105 = vmatprep.subr.bf16.mxu0 0
    %106 = vmatpush1.bf16.msra.mxu0 %v90
    %107 = vmatprep.subr.bf16.mxu0 0
    %108 = vmatpush1.bf16.msra.mxu0 %v89
    %109 = vmatprep.subr.bf16.mxu0 0
    %110 = vmatpush1.bf16.msra.mxu0 %v88
    %111 = vmatprep.subr.bf16.mxu0 0
    %112 = vmatpush1.bf16.msra.mxu0 %v87
    %113 = vmatprep.subr.bf16.mxu0 0
    %114 = vmatpush1.bf16.msra.mxu0 %v86
    %115 = vmatprep.subr.bf16.mxu0 0
    %116 = vmatpush1.bf16.msra.mxu0 %v85
    %117 = vmatprep.subr.bf16.mxu0 0
    %118 = vmatpush2.bf16.msra.mxu0 0
    %119 = vmatprep.subr.bf16.mxu0 0
    %120 = vmatpush2.bf16.msra.mxu0 0
    %121 = vmatprep.subr.bf16.mxu0 0
    %122 = vmatpush2.bf16.msra.mxu0 0
    %123 = vmatprep.subr.bf16.mxu0 0
    %124 = vmatpush2.bf16.msra.mxu0 0
    %125 = vmatprep.subr.bf16.mxu0 0
    %126 = vmatpush2.bf16.msra.mxu0 0
    %127 = vmatprep.subr.bf16.mxu0 0
    %128 = vmatpush2.bf16.msra.mxu0 0
    %129 = vmatprep.subr.bf16.mxu0 0
    %130 = vmatpush2.bf16.msra.mxu0 0
    %131 = vmatprep.subr.bf16.mxu0 0
    %132 = vmatpush2.bf16.msra.mxu0 0
    %133 = vmatprep.mubr.bf16.mxu0 0
    %134 = vmatmul.mubr.bf16.gmra.mxu0 %v51
    %v135 = vpop.f32.mrf.mxu0
    %v136 = vadd.f32 %v45, %v135
    %v137 = vpop.f32.mrf.mxu0
    %v138 = vpop.f32.mrf.mxu0
    %v139 = vadd.f32 %v45, %v138
    %v140 = vpop.f32.mrf.mxu0
    %141 = vdwg.mxu0
    %v142 = vmul.f32 %v136, 0.5
    %v143 = vmul.f32 %v139, 0.5
    %v144 = vmul.f32 %v136, 0.70710677
    %v145 = vmul.f32 %v139, 0.70710677
    %v146 = verf.f32.pop %v144
    %v147 = verf.f32.pop %v145
    %v148 = vadd.f32 %v146, 1.0
    %v149 = vadd.f32 %v147, 1.0
    %v150 = vmul.f32 %v142, %v148
    %v151 = vmul.f32 %v143, %v149
    %v152 = vpack.c.bf16 %v151, %v150
    %v153 = vld [vmem:[%s3] sm:$0xf]
    %v154 = vld [vmem:[%s3 + $0x4] sm:$0xf]
    %v155 = vld [vmem:[%s3 + $0x8] sm:$0xf]
    %v156 = vld [vmem:[%s3 + $0xc] sm:$0xf]
    %v157 = vld [vmem:[%s3 + $0x10] sm:$0xf]
    %v158 = vld [vmem:[%s3 + $0x14] sm:$0xf]
    %v159 = vld [vmem:[%s3 + $0x18] sm:$0xf]
    %v160 = vld [vmem:[%s3 + $0x1c] sm:$0xf]
    %v161 = vld [vmem:[%s4] sm:$0x1]
    %v163 = vlaneseq
    %v164 = vshrl.u32 %v163, 7
    %v165 = vsub.s32 0, %v164
    %v166 = vrot.slane %v161, %v165
    %v176 = vunpack.c.l.b16 %v153
    %v177 = vunpack.c.l.b16 %v154
    %v178 = vunpack.c.l.b16 %v155
    %v179 = vunpack.c.l.b16 %v156
    %v180 = vunpack.c.l.b16 %v157
    %v181 = vunpack.c.l.b16 %v158
    %v182 = vunpack.c.l.b16 %v159
    %v183 = vunpack.c.l.b16 %v160
    %v184 = vpack.c.b16 %v177, %v176
    %v185 = vpack.c.b16 %v179, %v178
    %v186 = vpack.c.b16 %v181, %v180
    %v187 = vpack.c.b16 %v183, %v182
    %vm192 = vcmask 523264
    %v194 = vsel %vm192, %v152, 0
    %196 = vmatprep.subr.bf16.mxu0 0
    %197 = vmatpush1.bf16.msra.mxu0 0
    %198 = vmatprep.subr.bf16.mxu0 0
    %199 = vmatpush1.bf16.msra.mxu0 0
    %200 = vmatprep.subr.bf16.mxu0 0
    %201 = vmatpush1.bf16.msra.mxu0 0
    %202 = vmatprep.subr.bf16.mxu0 0
    %203 = vmatpush1.bf16.msra.mxu0 0
    %204 = vmatprep.subr.bf16.mxu0 0
    %205 = vmatpush1.bf16.msra.mxu0 %v187
    %206 = vmatprep.subr.bf16.mxu0 0
    %207 = vmatpush1.bf16.msra.mxu0 %v186
    %208 = vmatprep.subr.bf16.mxu0 0
    %209 = vmatpush1.bf16.msra.mxu0 %v185
    %210 = vmatprep.subr.bf16.mxu0 0
    %211 = vmatpush1.bf16.msra.mxu0 %v184
    %212 = vmatprep.subr.bf16.mxu0 0
    %213 = vmatpush2.bf16.msra.mxu0 0
    %214 = vmatprep.subr.bf16.mxu0 0
    %215 = vmatpush2.bf16.msra.mxu0 0
    %216 = vmatprep.subr.bf16.mxu0 0
    %217 = vmatpush2.bf16.msra.mxu0 0
    %218 = vmatprep.subr.bf16.mxu0 0
    %219 = vmatpush2.bf16.msra.mxu0 0
    %220 = vmatprep.subr.bf16.mxu0 0
    %221 = vmatpush2.bf16.msra.mxu0 0
    %222 = vmatprep.subr.bf16.mxu0 0
    %223 = vmatpush2.bf16.msra.mxu0 0
    %224 = vmatprep.subr.bf16.mxu0 0
    %225 = vmatpush2.bf16.msra.mxu0 0
    %226 = vmatprep.subr.bf16.mxu0 0
    %227 = vmatpush2.bf16.msra.mxu0 0
    %228 = vmatprep.mubr.bf16.mxu0 0
    %229 = vmatmul.mubr.bf16.gmra.mxu0 %v194
    %v230 = vpop.f32.mrf.mxu0
    %v231 = vadd.f32 %v166, %v230
    %v232 = vpop.f32.mrf.mxu0
    %v233 = vpop.f32.mrf.mxu0
    %v234 = vadd.f32 %v166, %v233
    %v235 = vpop.f32.mrf.mxu0
    %236 = vdwg.mxu0
    %v237 = vxor.u32 %v231, 2147483648
    %v238 = vxor.u32 %v234, 2147483648
    %v239 = vmul.f32 %v237, 1.442695
    %v240 = vpow.pop %v239
    %v241 = vmul.f32 %v238, 1.442695
    %v242 = vpow.pop %v241
    %v243 = vadd.f32 %v240, 1.0
    %v244 = vadd.f32 %v242, 1.0
    %v245 = vrcp.pop %v243
    %v246 = vmul.f32 1.0, %v245
    %v247 = vrcp.pop %v244
    %v248 = vmul.f32 1.0, %v247
    %249 = vst [vmem:[#allocation2] sm:$0xff] %v246
    %250 = vst [vmem:[#allocation2 + $0x8] sm:$0xff] %v248
    // Predicated region
    $region22: #{tpu_custom_call.1} parent=1 // pred_check
      _
    $region23: #{tpu_custom_call.1} parent=1 // pred_check_branch
      %252 = sbr.rel (0) target = $region25
    $region24: #{tpu_custom_call.1} parent=1 // pred_region
      %s254 = ssub.s32 256, 256
      %255 = vsyncadd [#allocation3], %s254
      %s256 = sshll.u32 [#allocation2], 4
      %s257 = int_to_ptr.vmem [resolvable:$true] %s256
      %262 = dma.vmem_to_hbm [thread:$0]  %s257, 256, %s5, [#allocation3], 128, 128, 8
    $region25: #{tpu_custom_call.1} parent=1 // pred_fallthru
      _
    // Predicated region
    $region26: #{tpu_custom_call.1} parent=1 // pred_check
      _
    $region27: #{tpu_custom_call.1} parent=1 // pred_check_branch
      %264 = sbr.rel (0) target = $region29
    $region28: #{tpu_custom_call.1} parent=1 // pred_region
      %265 = dma.done [#allocation3], 256
    $region29: #{tpu_custom_call.1} parent=1 // pred_fallthru
      _
    %266 = vsyncpa [#allocation3], 1

</llo_original>
